<compile_context>
chip_gen: v5e
topology: v5e:2x2
jax: 0.10.0
libtpu: 0.0.40
codegen_flags: <defaults>
</compile_context>

<pallas_src>
import functools

import jax
import jax.numpy as jnp
from jax import lax
from jax.experimental import pallas as pl
from jax.experimental.pallas import tpu as pltpu


# ----------------------------------------------------------------------------
# helpers
# ----------------------------------------------------------------------------
def _pick_hw_tile(hw_pad):
    """Largest lane-aligned spatial tile <= 1024 dividing hw_pad (multiple of 128).

    1024 amortizes the ~0.35us per-grid-step overhead while staying inside the
    v7x 64 MiB VMEM budget at realistic Cf; v5e/v6e (128 MiB) could go to 2048.
    """
    for t in (1024, 512, 256, 128):
        if hw_pad % t == 0:
            return t
    return hw_pad  # unreachable when hw_pad % 128 == 0


# ----------------------------------------------------------------------------
# fused kernel: backbone -> transfer -> content/style losses -> pooled sums
# ----------------------------------------------------------------------------
def _fused_forward_kernel(x_ref, wb_ref, bb_ref, weff_ref, bt_ref,
                          pooled_b_ref, pooled_f_ref, closs_ref, sloss_ref,
                          gram_b_acc, gram_f_acc, pool_b_acc, pool_f_acc,
                          cl_acc, *, n_imgs, thw, hw_valid, needs_mask,
                          content_scale, gram_scale, inv_gram_sq):
    j = pl.program_id(0)

    @pl.when(j == 0)
    def _():
        gram_b_acc[...] = jnp.zeros_like(gram_b_acc)
        gram_f_acc[...] = jnp.zeros_like(gram_f_acc)
        pool_b_acc[...] = jnp.zeros_like(pool_b_acc)
        pool_f_acc[...] = jnp.zeros_like(pool_f_acc)
        cl_acc[...] = jnp.zeros_like(cl_acc)

    wb = wb_ref[...]        # (Cf, Cin)
    bb = bb_ref[...]        # (Cf, 1)
    weff = weff_ref[...]    # (Cf, Cf)  = w_top + w_bot (fixed == raw fold)
    bt = bt_ref[...]        # (Cf, 1)

    # Backbone + transfer per image while the tile lives in registers/VMEM.
    yb_list, yf_list = [], []
    for n in range(n_imgs):                              # static unroll, N small
        xn = x_ref[n]                                    # (Cin, thw)
        yb = jnp.dot(wb, xn, preferred_element_type=jnp.float32) + bb
        yf = jnp.dot(weff, yb, preferred_element_type=jnp.float32) + bt
        yb_list.append(yb)
        yf_list.append(yf)
    if n_imgs > 1:
        yb_all = jnp.concatenate(yb_list, axis=0)        # (N*Cf, thw) n-major,
        yf_all = jnp.concatenate(yf_list, axis=0)        # same order as .view()
    else:
        yb_all, yf_all = yb_list[0], yf_list[0]

    if needs_mask:  # static python bool; only traced when HW was lane-padded
        col = j * thw + lax.broadcasted_iota(jnp.int32, (1, thw), 1)
        valid = (col < hw_valid).astype(yf_all.dtype)
        yb_all = yb_all * valid                          # zero bias in the pad
        yf_all = yf_all * valid

    # Global-avg-pool partial sums for the two heads (finished in the wrapper).
    pool_b_acc[...] += jnp.sum(yb_all, axis=-1, keepdims=True)
    pool_f_acc[...] += jnp.sum(yf_all, axis=-1, keepdims=True)

    # ContentLoss partial: sum((feature_final - features_fixed)^2).
    d = yf_all - yb_all
    cl_acc[...] += jnp.sum(d * d, keepdims=True)

    # Gram accumulation (contract the H*W chunk axis of both operands).
    dn = (((1,), (1,)), ((), ()))
    gram_b_acc[...] += lax.dot_general(yb_all, yb_all, dimension_numbers=dn,
                                       preferred_element_type=jnp.float32)
    gram_f_acc[...] += lax.dot_general(yf_all, yf_all, dimension_numbers=dn,
                                       preferred_element_type=jnp.float32)

    @pl.when(j == pl.num_programs(0) - 1)
    def _():
        pooled_b_ref[...] = pool_b_acc[...]
        pooled_f_ref[...] = pool_f_acc[...]
        # ContentLoss = mean over N*Cf*H*W elements.
        closs_ref[0, 0] = jnp.sum(cl_acc[...]) * content_scale
        # StyleLoss = mean over (NC, NC) of (gram(final) - gram(raw))^2,
        # each gram pre-divided by N*Cf*H*W (gram_matrix semantics).
        diff = (gram_f_acc[...] - gram_b_acc[...]) * gram_scale
        sloss_ref[0, 0] = jnp.sum(diff * diff) * inv_gram_sq


def fused_forward(x, backbone_w, backbone_b, w_eff, transfer_b):
    """One pallas_call: backbone + transfer + ContentLoss + StyleLoss + pools.

    x: (N, Cin, H*W) float32 (NCHW kept, lane-dense spatial axis).
    Returns (pooled_backbone_sums (N,Cf), pooled_final_sums (N,Cf),
             content_loss scalar, style_loss scalar).
    """
    N, Cin, hw = x.shape
    Cf = backbone_w.shape[0]
    NC = N * Cf

    # Pad the spatial axis to a lane multiple; the tail is masked in-kernel.
    hw_pad = ((hw + 127) // 128) * 128
    if hw_pad != hw:
        x = jnp.pad(x, ((0, 0), (0, 0), (0, hw_pad - hw)))
    thw = _pick_hw_tile(hw_pad)
    n_steps = hw_pad // thw

    content_scale = 1.0 / float(N * Cf * hw)   # F.mse_loss 'mean'
    gram_scale = 1.0 / float(N * Cf * hw)      # gram_matrix .div(a*b*c*d)
    inv_gram_sq = 1.0 / float(NC * NC)         # MSE mean over the gram

    flops = 2 * N * Cf * hw_pad * (Cin + Cf) + 4 * NC * NC * hw_pad
    bytes_accessed = 4 * (N * Cin * hw_pad + Cf * Cin + Cf * Cf + 2 * Cf
                          + 2 * NC + 2)

    kernel = functools.partial(
        _fused_forward_kernel, n_imgs=N, thw=thw, hw_valid=hw,
        needs_mask=(hw_pad != hw), content_scale=content_scale,
        gram_scale=gram_scale, inv_gram_sq=inv_gram_sq)

    pooled_b, pooled_f, closs, sloss = pl.pallas_call(
        kernel,
        out_shape=(
            jax.ShapeDtypeStruct((NC, 1), jnp.float32),   # backbone pool sums
            jax.ShapeDtypeStruct((NC, 1), jnp.float32),   # transfer pool sums
            jax.ShapeDtypeStruct((1, 1), jnp.float32),    # content loss
            jax.ShapeDtypeStruct((1, 1), jnp.float32),    # style loss
        ),
        grid=(n_steps,),
        in_specs=[
            pl.BlockSpec((N, Cin, thw), lambda j: (0, 0, j)),
            pl.BlockSpec((Cf, Cin), lambda j: (0, 0)),
            pl.BlockSpec((Cf, 1), lambda j: (0, 0)),
            pl.BlockSpec((Cf, Cf), lambda j: (0, 0)),
            pl.BlockSpec((Cf, 1), lambda j: (0, 0)),
        ],
        out_specs=(
            pl.BlockSpec((NC, 1), lambda j: (0, 0)),
            pl.BlockSpec((NC, 1), lambda j: (0, 0)),
            pl.BlockSpec(memory_space=pltpu.MemorySpace.SMEM),
            pl.BlockSpec(memory_space=pltpu.MemorySpace.SMEM),
        ),
        scratch_shapes=[
            pltpu.VMEM((NC, NC), jnp.float32),   # gram(features_raw)
            pltpu.VMEM((NC, NC), jnp.float32),   # gram(feature_final)
            pltpu.VMEM((NC, 1), jnp.float32),    # pooled backbone sums
            pltpu.VMEM((NC, 1), jnp.float32),    # pooled final sums
            pltpu.VMEM((1, 1), jnp.float32),     # content-loss partial
        ],
        compiler_params=pltpu.CompilerParams(
            # Single reduction axis over H*W tiles; everything is a global
            # reduction so there is no megacore-parallel axis here.
            dimension_semantics=("arbitrary",)),
        cost_estimate=pl.CostEstimate(flops=int(flops), transcendentals=0,
                                      bytes_accessed=int(bytes_accessed)),
    )(x, backbone_w, backbone_b, w_eff, transfer_b)

    return (pooled_b.reshape(N, Cf), pooled_f.reshape(N, Cf),
            closs[0, 0], sloss[0, 0])


# ----------------------------------------------------------------------------
# KeypointDetector forward
# ----------------------------------------------------------------------------
class KeypointDetectorPallas:
    def __init__(self, key, in_channels=4, feat_channels=32,
                 head_out=8, para_out=2):
        ks = jax.random.split(key, 9)
        s = 0.05
        # Weights stored ready for the (Cout, Cin) @ (Cin, HW) lowering.
        self.backbone_w = s * jax.random.normal(ks[0], (feat_channels, in_channels), jnp.float32)
        self.backbone_b = s * jax.random.normal(ks[1], (feat_channels, 1), jnp.float32)
        # transfer weight (2*Cf -> Cf) kept as the two halves acting on
        # (features_fixed, features_raw); folded at call time (see forward).
        self.transfer_w_top = s * jax.random.normal(ks[2], (feat_channels, feat_channels), jnp.float32)
        self.transfer_w_bot = s * jax.random.normal(ks[3], (feat_channels, feat_channels), jnp.float32)
        self.transfer_b = s * jax.random.normal(ks[4], (feat_channels, 1), jnp.float32)
        self.heads_w = s * jax.random.normal(ks[5], (feat_channels, head_out), jnp.float32)
        self.heads_b = s * jax.random.normal(ks[6], (1, head_out), jnp.float32)
        self.heads_para_w = s * jax.random.normal(ks[7], (feat_channels, para_out), jnp.float32)
        self.heads_para_b = s * jax.random.normal(ks[8], (1, para_out), jnp.float32)
        # Gate for the w_top + w_bot fold: only valid while the warp below is
        # an identity (features_fixed == features_raw).
        self.warp_is_identity = True

    def external_parameters_fix(self, images, p_result):
        # TODO(synk): cv2.warpPerspective (per-image homography resampling with
        # K, pitch/roll rotations and a matrix inverse) has no clean Pallas
        # equivalent; images pass through unchanged.
        return images

    def __call__(self, images, targets=None, training=False):
        N, C, H, W = images.shape
        hw = H * W
        x = images.reshape(N, C, hw)          # NCHW kept, no transposes

        _ = self.external_parameters_fix(images, None)  # identity (see TODO)

        # Because the warp is a pass-through, backbone(images_fixed) ==
        # backbone(images): the reference's three identical backbone calls
        # collapse to one, and the concat transfer conv folds to a single
        # (Cf, Cf) matmul.  If the warp is ever implemented, this fold must be
        # replaced with the concat-free two-input / two-matmul form.
        if not self.warp_is_identity:
            raise NotImplementedError("non-identity warp needs the unfolded "
                                      "two-input transfer kernel")
        w_eff = self.transfer_w_top + self.transfer_w_bot

        (pooled_backbone_sums, pooled_final_sums,
         content_loss, style_loss) = fused_forward(
            x, self.backbone_w, self.backbone_b, w_eff, self.transfer_b)

        # Heads: finish the global average pool + tiny linears in plain jnp
        # (a dedicated kernel launch for ~1 KFLOP was pure overhead).
        inv_hw = 1.0 / float(hw)
        pooled_final = pooled_final_sums * inv_hw          # (N, Cf)
        pooled_backbone = pooled_backbone_sums * inv_hw    # (N, Cf)
        result = jnp.dot(pooled_final, self.heads_w) + self.heads_b
        P_result = jnp.dot(pooled_backbone, self.heads_para_w) + self.heads_para_b
        del P_result  # only feeds the pass-through external_parameters_fix

        if training:
            # para_losses / detector_losses come from the cfg-built heads; the
            # synthetic heads here produce no auxiliary losses.
            return dict(content_loss=content_loss, style_loss=style_loss)
        # (the PyTorch code builds result_expand but returns `result`)
        return result


# ----------------------------------------------------------------------------
if __name__ == "__main__":
    key = jax.random.PRNGKey(0)
    images = jax.random.normal(key, (2, 4, 16, 16), jnp.float32)  # NCHW

    model = KeypointDetectorPallas(jax.random.PRNGKey(42))

    result = model(images)                        # eval path -> (2, 8)
    losses = model(images, training=True)         # training loss dict
    jax.block_until_ready(result)
    jax.block_until_ready(losses["content_loss"])
    jax.block_until_ready(losses["style_loss"])

    assert result.shape == (2, 8)
    assert bool(jnp.all(jnp.isfinite(result)))
    assert bool(jnp.isfinite(losses["content_loss"]))
    assert bool(jnp.isfinite(losses["style_loss"]))
    print("KERNEL_OK")
</pallas_src>

<mosaic_0001>
module attributes {stable_mosaic.version = 11 : i64} {
  func.func @_fused_forward_kernel(%arg0: i32, %arg1: memref<2x4x256xf32, #tpu.memory_space<vmem>>, %arg2: memref<32x4xf32, #tpu.memory_space<vmem>>, %arg3: memref<32x1xf32, #tpu.memory_space<vmem>>, %arg4: memref<32x32xf32, #tpu.memory_space<vmem>>, %arg5: memref<32x1xf32, #tpu.memory_space<vmem>>, %arg6: memref<64x1xf32, #tpu.memory_space<vmem>>, %arg7: memref<64x1xf32, #tpu.memory_space<vmem>>, %arg8: memref<1x1xf32, #tpu.memory_space<smem>>, %arg9: memref<1x1xf32, #tpu.memory_space<smem>>, %arg10: memref<64x64xf32, #tpu.memory_space<vmem>>, %arg11: memref<64x64xf32, #tpu.memory_space<vmem>>, %arg12: memref<64x1xf32, #tpu.memory_space<vmem>>, %arg13: memref<64x1xf32, #tpu.memory_space<vmem>>, %arg14: memref<1x1xf32, #tpu.memory_space<vmem>>) attributes {dimension_semantics = [#tpu.dimension_semantics<arbitrary>], iteration_bounds = array<i64: 1>, scalar_prefetch = 0 : i64, scratch_operands = 5 : i64, tpu.core_type = #tpu.core_type<tc>, window_params = [{transform_indices = @transform_0, window_bounds = array<i64: 2, 4, 256>}, {pipeline_mode = #tpu.pipeline_mode<synchronous>, transform_indices = @transform_1, window_bounds = array<i64: 32, 4>}, {pipeline_mode = #tpu.pipeline_mode<synchronous>, transform_indices = @transform_2, window_bounds = array<i64: 32, 1>}, {pipeline_mode = #tpu.pipeline_mode<synchronous>, transform_indices = @transform_3, window_bounds = array<i64: 32, 32>}, {pipeline_mode = #tpu.pipeline_mode<synchronous>, transform_indices = @transform_4, window_bounds = array<i64: 32, 1>}, {pipeline_mode = #tpu.pipeline_mode<synchronous>, transform_indices = @transform_5, window_bounds = array<i64: 64, 1>}, {pipeline_mode = #tpu.pipeline_mode<synchronous>, transform_indices = @transform_6, window_bounds = array<i64: 64, 1>}, {transform_indices = @transform_7, window_bounds = array<i64: 1, 1>}, {transform_indices = @transform_8, window_bounds = array<i64: 1, 1>}]} {
    %c0_i32 = arith.constant 0 : i32
    %0 = arith.cmpi eq, %arg0, %c0_i32 : i32
    %1 = arith.extui %0 : i1 to i32
    %c0_i32_0 = arith.constant 0 : i32
    %2 = arith.cmpi ne, %1, %c0_i32_0 : i32
    scf.if %2 {
      %cst_43 = arith.constant 0.000000e+00 : f32
      %56 = vector.broadcast %cst_43 : f32 to vector<64x64xf32>
      %c0_44 = arith.constant 0 : index
      %c0_45 = arith.constant 0 : index
      %57 = vector.load %arg10[%c0_44, %c0_45] : memref<64x64xf32, #tpu.memory_space<vmem>>, vector<64x64xf32>
      tpu.vector_store %arg10[%c0_44, %c0_45], %56 {strides = array<i32>} : memref<64x64xf32, #tpu.memory_space<vmem>>, vector<64x64xf32>,
      %cst_46 = arith.constant 0.000000e+00 : f32
      %58 = vector.broadcast %cst_46 : f32 to vector<64x64xf32>
      %c0_47 = arith.constant 0 : index
      %c0_48 = arith.constant 0 : index
      %59 = vector.load %arg11[%c0_47, %c0_48] : memref<64x64xf32, #tpu.memory_space<vmem>>, vector<64x64xf32>
      tpu.vector_store %arg11[%c0_47, %c0_48], %58 {strides = array<i32>} : memref<64x64xf32, #tpu.memory_space<vmem>>, vector<64x64xf32>,
      %cst_49 = arith.constant 0.000000e+00 : f32
      %60 = vector.broadcast %cst_49 : f32 to vector<64x1xf32>
      %c0_50 = arith.constant 0 : index
      %c0_51 = arith.constant 0 : index
      %61 = vector.load %arg12[%c0_50, %c0_51] : memref<64x1xf32, #tpu.memory_space<vmem>>, vector<64x1xf32>
      tpu.vector_store %arg12[%c0_50, %c0_51], %60 {strides = array<i32>} : memref<64x1xf32, #tpu.memory_space<vmem>>, vector<64x1xf32>,
      %cst_52 = arith.constant 0.000000e+00 : f32
      %62 = vector.broadcast %cst_52 : f32 to vector<64x1xf32>
      %c0_53 = arith.constant 0 : index
      %c0_54 = arith.constant 0 : index
      %63 = vector.load %arg13[%c0_53, %c0_54] : memref<64x1xf32, #tpu.memory_space<vmem>>, vector<64x1xf32>
      tpu.vector_store %arg13[%c0_53, %c0_54], %62 {strides = array<i32>} : memref<64x1xf32, #tpu.memory_space<vmem>>, vector<64x1xf32>,
      %cst_55 = arith.constant 0.000000e+00 : f32
      %64 = vector.broadcast %cst_55 : f32 to vector<1x1xf32>
      %c0_56 = arith.constant 0 : index
      %c0_57 = arith.constant 0 : index
      %65 = vector.load %arg14[%c0_56, %c0_57] : memref<1x1xf32, #tpu.memory_space<vmem>>, vector<1x1xf32>
      tpu.vector_store %arg14[%c0_56, %c0_57], %64 {strides = array<i32>} : memref<1x1xf32, #tpu.memory_space<vmem>>, vector<1x1xf32>,
    } else {
    }
    %c0 = arith.constant 0 : index
    %c0_1 = arith.constant 0 : index
    %3 = vector.load %arg2[%c0, %c0_1] : memref<32x4xf32, #tpu.memory_space<vmem>>, vector<32x4xf32>
    %c0_2 = arith.constant 0 : index
    %c0_3 = arith.constant 0 : index
    %4 = vector.load %arg3[%c0_2, %c0_3] : memref<32x1xf32, #tpu.memory_space<vmem>>, vector<32x1xf32>
    %c0_4 = arith.constant 0 : index
    %c0_5 = arith.constant 0 : index
    %5 = vector.load %arg4[%c0_4, %c0_5] : memref<32x32xf32, #tpu.memory_space<vmem>>, vector<32x32xf32>
    %c0_6 = arith.constant 0 : index
    %c0_7 = arith.constant 0 : index
    %6 = vector.load %arg5[%c0_6, %c0_7] : memref<32x1xf32, #tpu.memory_space<vmem>>, vector<32x1xf32>
    %c0_8 = arith.constant 0 : index
    %c0_9 = arith.constant 0 : index
    %c0_10 = arith.constant 0 : index
    %7 = vector.load %arg1[%c0_8, %c0_9, %c0_10] : memref<2x4x256xf32, #tpu.memory_space<vmem>>, vector<1x4x256xf32>
    %8 = vector.shape_cast %7 : vector<1x4x256xf32> to vector<4x256xf32>
    %cst = arith.constant dense<0.000000e+00> : vector<32x256xf32>
    %9 = tpu.matmul %3, %8, %cst {dimension_numbers = #tpu.dot_dimension_numbers<[1], [0], [0], [1], [0, 0, 1, 1], [], []>} : vector<32x4xf32>, vector<4x256xf32>, vector<32x256xf32> -> vector<32x256xf32>
    %10 = vector.broadcast %4 : vector<32x1xf32> to vector<32x256xf32>
    %11 = arith.addf %9, %10 : vector<32x256xf32>
    %cst_11 = arith.constant dense<0.000000e+00> : vector<32x256xf32>
    %12 = tpu.matmul %5, %11, %cst_11 {dimension_numbers = #tpu.dot_dimension_numbers<[1], [0], [0], [1], [0, 0, 1, 1], [], []>} : vector<32x32xf32>, vector<32x256xf32>, vector<32x256xf32> -> vector<32x256xf32>
    %13 = vector.broadcast %6 : vector<32x1xf32> to vector<32x256xf32>
    %14 = arith.addf %12, %13 : vector<32x256xf32>
    %c1 = arith.constant 1 : index
    %c0_12 = arith.constant 0 : index
    %c0_13 = arith.constant 0 : index
    %15 = vector.load %arg1[%c1, %c0_12, %c0_13] : memref<2x4x256xf32, #tpu.memory_space<vmem>>, vector<1x4x256xf32>
    %16 = vector.shape_cast %15 : vector<1x4x256xf32> to vector<4x256xf32>
    %cst_14 = arith.constant dense<0.000000e+00> : vector<32x256xf32>
    %17 = tpu.matmul %3, %16, %cst_14 {dimension_numbers = #tpu.dot_dimension_numbers<[1], [0], [0], [1], [0, 0, 1, 1], [], []>} : vector<32x4xf32>, vector<4x256xf32>, vector<32x256xf32> -> vector<32x256xf32>
    %18 = vector.broadcast %4 : vector<32x1xf32> to vector<32x256xf32>
    %19 = arith.addf %17, %18 : vector<32x256xf32>
    %cst_15 = arith.constant dense<0.000000e+00> : vector<32x256xf32>
    %20 = tpu.matmul %5, %19, %cst_15 {dimension_numbers = #tpu.dot_dimension_numbers<[1], [0], [0], [1], [0, 0, 1, 1], [], []>} : vector<32x32xf32>, vector<32x256xf32>, vector<32x256xf32> -> vector<32x256xf32>
    %21 = vector.broadcast %6 : vector<32x1xf32> to vector<32x256xf32>
    %22 = arith.addf %20, %21 : vector<32x256xf32>
    %23 = tpu.concatenate %11, %19 in 0 : vector<32x256xf32>, vector<32x256xf32> -> vector<64x256xf32>
    %24 = tpu.concatenate %14, %22 in 0 : vector<32x256xf32>, vector<32x256xf32> -> vector<64x256xf32>
    %c0_16 = arith.constant 0 : index
    %c0_17 = arith.constant 0 : index
    %25 = vector.load %arg12[%c0_16, %c0_17] : memref<64x1xf32, #tpu.memory_space<vmem>>, vector<64x1xf32>
    %cst_18 = arith.constant dense<0.000000e+00> : vector<64xf32>
    %26 = vector.multi_reduction <add>, %23, %cst_18 [1] : vector<64x256xf32> to vector<64xf32>
    %27 = vector.shape_cast %26 : vector<64xf32> to vector<64x1xf32>
    %28 = arith.addf %25, %27 : vector<64x1xf32>
    %c0_19 = arith.constant 0 : index
    %c0_20 = arith.constant 0 : index
    %29 = vector.load %arg12[%c0_19, %c0_20] : memref<64x1xf32, #tpu.memory_space<vmem>>, vector<64x1xf32>
    tpu.vector_store %arg12[%c0_19, %c0_20], %28 {strides = array<i32>} : memref<64x1xf32, #tpu.memory_space<vmem>>, vector<64x1xf32>,
    %c0_21 = arith.constant 0 : index
    %c0_22 = arith.constant 0 : index
    %30 = vector.load %arg13[%c0_21, %c0_22] : memref<64x1xf32, #tpu.memory_space<vmem>>, vector<64x1xf32>
    %cst_23 = arith.constant dense<0.000000e+00> : vector<64xf32>
    %31 = vector.multi_reduction <add>, %24, %cst_23 [1] : vector<64x256xf32> to vector<64xf32>
    %32 = vector.shape_cast %31 : vector<64xf32> to vector<64x1xf32>
    %33 = arith.addf %30, %32 : vector<64x1xf32>
    %c0_24 = arith.constant 0 : index
    %c0_25 = arith.constant 0 : index
    %34 = vector.load %arg13[%c0_24, %c0_25] : memref<64x1xf32, #tpu.memory_space<vmem>>, vector<64x1xf32>
    tpu.vector_store %arg13[%c0_24, %c0_25], %33 {strides = array<i32>} : memref<64x1xf32, #tpu.memory_space<vmem>>, vector<64x1xf32>,
    %35 = arith.subf %24, %23 : vector<64x256xf32>
    %c0_26 = arith.constant 0 : index
    %c0_27 = arith.constant 0 : index
    %36 = vector.load %arg14[%c0_26, %c0_27] : memref<1x1xf32, #tpu.memory_space<vmem>>, vector<1x1xf32>
    %37 = arith.mulf %35, %35 : vector<64x256xf32>
    %38 = vector.shape_cast %37 : vector<64x256xf32> to vector<1x64x256xf32>
    %cst_28 = arith.constant dense<0.000000e+00> : vector<1xf32>
    %39 = vector.multi_reduction <add>, %38, %cst_28 [1, 2] : vector<1x64x256xf32> to vector<1xf32>
    %40 = vector.shape_cast %39 : vector<1xf32> to vector<1x1x1xf32>
    %41 = vector.extract %40[0, 0, 0] : f32 from vector<1x1x1xf32>
    %42 = vector.broadcast %41 : f32 to vector<1x1xf32>
    %43 = arith.addf %36, %42 : vector<1x1xf32>
    %c0_29 = arith.constant 0 : index
    %c0_30 = arith.constant 0 : index
    %44 = vector.load %arg14[%c0_29, %c0_30] : memref<1x1xf32, #tpu.memory_space<vmem>>, vector<1x1xf32>
    tpu.vector_store %arg14[%c0_29, %c0_30], %43 {strides = array<i32>} : memref<1x1xf32, #tpu.memory_space<vmem>>, vector<1x1xf32>,
    %c0_31 = arith.constant 0 : index
    %c0_32 = arith.constant 0 : index
    %45 = vector.load %arg10[%c0_31, %c0_32] : memref<64x64xf32, #tpu.memory_space<vmem>>, vector<64x64xf32>
    %cst_33 = arith.constant dense<0.000000e+00> : vector<64x64xf32>
    %46 = tpu.matmul %23, %23, %cst_33 {dimension_numbers = #tpu.dot_dimension_numbers<[1], [1], [0], [0], [0, 0, 1, 0], [], []>} : vector<64x256xf32>, vector<64x256xf32>, vector<64x64xf32> -> vector<64x64xf32>
    %47 = arith.addf %45, %46 : vector<64x64xf32>
    %c0_34 = arith.constant 0 : index
    %c0_35 = arith.constant 0 : index
    %48 = vector.load %arg10[%c0_34, %c0_35] : memref<64x64xf32, #tpu.memory_space<vmem>>, vector<64x64xf32>
    tpu.vector_store %arg10[%c0_34, %c0_35], %47 {strides = array<i32>} : memref<64x64xf32, #tpu.memory_space<vmem>>, vector<64x64xf32>,
    %c0_36 = arith.constant 0 : index
    %c0_37 = arith.constant 0 : index
    %49 = vector.load %arg11[%c0_36, %c0_37] : memref<64x64xf32, #tpu.memory_space<vmem>>, vector<64x64xf32>
    %cst_38 = arith.constant dense<0.000000e+00> : vector<64x64xf32>
    %50 = tpu.matmul %24, %24, %cst_38 {dimension_numbers = #tpu.dot_dimension_numbers<[1], [1], [0], [0], [0, 0, 1, 0], [], []>} : vector<64x256xf32>, vector<64x256xf32>, vector<64x64xf32> -> vector<64x64xf32>
    %51 = arith.addf %49, %50 : vector<64x64xf32>
    %c0_39 = arith.constant 0 : index
    %c0_40 = arith.constant 0 : index
    %52 = vector.load %arg11[%c0_39, %c0_40] : memref<64x64xf32, #tpu.memory_space<vmem>>, vector<64x64xf32>
    tpu.vector_store %arg11[%c0_39, %c0_40], %51 {strides = array<i32>} : memref<64x64xf32, #tpu.memory_space<vmem>>, vector<64x64xf32>,
    %c0_i32_41 = arith.constant 0 : i32
    %53 = arith.cmpi eq, %arg0, %c0_i32_41 : i32
    %54 = arith.extui %53 : i1 to i32
    %c0_i32_42 = arith.constant 0 : i32
    %55 = arith.cmpi ne, %54, %c0_i32_42 : i32
    scf.if %55 {
      %c0_43 = arith.constant 0 : index
      %c0_44 = arith.constant 0 : index
      %56 = vector.load %arg12[%c0_43, %c0_44] : memref<64x1xf32, #tpu.memory_space<vmem>>, vector<64x1xf32>
      %c0_45 = arith.constant 0 : index
      %c0_46 = arith.constant 0 : index
      %57 = vector.load %arg6[%c0_45, %c0_46] : memref<64x1xf32, #tpu.memory_space<vmem>>, vector<64x1xf32>
      tpu.vector_store %arg6[%c0_45, %c0_46], %56 {strides = array<i32>} : memref<64x1xf32, #tpu.memory_space<vmem>>, vector<64x1xf32>,
      %c0_47 = arith.constant 0 : index
      %c0_48 = arith.constant 0 : index
      %58 = vector.load %arg13[%c0_47, %c0_48] : memref<64x1xf32, #tpu.memory_space<vmem>>, vector<64x1xf32>
      %c0_49 = arith.constant 0 : index
      %c0_50 = arith.constant 0 : index
      %59 = vector.load %arg7[%c0_49, %c0_50] : memref<64x1xf32, #tpu.memory_space<vmem>>, vector<64x1xf32>
      tpu.vector_store %arg7[%c0_49, %c0_50], %58 {strides = array<i32>} : memref<64x1xf32, #tpu.memory_space<vmem>>, vector<64x1xf32>,
      %c0_51 = arith.constant 0 : index
      %c0_52 = arith.constant 0 : index
      %60 = vector.load %arg14[%c0_51, %c0_52] : memref<1x1xf32, #tpu.memory_space<vmem>>, vector<1x1xf32>
      %61 = vector.shape_cast %60 : vector<1x1xf32> to vector<1x1x1xf32>
      %cst_53 = arith.constant dense<0.000000e+00> : vector<1xf32>
      %62 = vector.multi_reduction <add>, %61, %cst_53 [1, 2] : vector<1x1x1xf32> to vector<1xf32>
      %63 = vector.shape_cast %62 : vector<1xf32> to vector<1x1x1xf32>
      %64 = vector.extract %63[0, 0, 0] : f32 from vector<1x1x1xf32>
      %cst_54 = arith.constant 6.10351563E-5 : f32
      %65 = arith.mulf %64, %cst_54 : f32
      %c0_55 = arith.constant 0 : index
      %c0_56 = arith.constant 0 : index
      %66 = memref.load %arg8[%c0_55, %c0_56] : memref<1x1xf32, #tpu.memory_space<smem>>
      memref.store %65, %arg8[%c0_55, %c0_56] : memref<1x1xf32, #tpu.memory_space<smem>>
      %c0_57 = arith.constant 0 : index
      %c0_58 = arith.constant 0 : index
      %67 = vector.load %arg11[%c0_57, %c0_58] : memref<64x64xf32, #tpu.memory_space<vmem>>, vector<64x64xf32>
      %c0_59 = arith.constant 0 : index
      %c0_60 = arith.constant 0 : index
      %68 = vector.load %arg10[%c0_59, %c0_60] : memref<64x64xf32, #tpu.memory_space<vmem>>, vector<64x64xf32>
      %69 = arith.subf %67, %68 : vector<64x64xf32>
      %cst_61 = arith.constant 6.10351563E-5 : f32
      %70 = vector.broadcast %cst_61 : f32 to vector<64x64xf32>
      %71 = arith.mulf %69, %70 : vector<64x64xf32>
      %72 = arith.mulf %71, %71 : vector<64x64xf32>
      %73 = vector.shape_cast %72 : vector<64x64xf32> to vector<1x64x64xf32>
      %cst_62 = arith.constant dense<0.000000e+00> : vector<1xf32>
      %74 = vector.multi_reduction <add>, %73, %cst_62 [1, 2] : vector<1x64x64xf32> to vector<1xf32>
      %75 = vector.shape_cast %74 : vector<1xf32> to vector<1x1x1xf32>
      %76 = vector.extract %75[0, 0, 0] : f32 from vector<1x1x1xf32>
      %cst_63 = arith.constant 2.44140625E-4 : f32
      %77 = arith.mulf %76, %cst_63 : f32
      %c0_64 = arith.constant 0 : index
      %c0_65 = arith.constant 0 : index
      %78 = memref.load %arg9[%c0_64, %c0_65] : memref<1x1xf32, #tpu.memory_space<smem>>
      memref.store %77, %arg9[%c0_64, %c0_65] : memref<1x1xf32, #tpu.memory_space<smem>>
    } else {
    }
    return
  }
  func.func @transform_0(%arg0: i32) -> (i32, i32, i32) {
    %c0_i32 = arith.constant 0 : i32
    %c0_i32_0 = arith.constant 0 : i32
    %c0_i32_1 = arith.constant 0 : i32
    return %c0_i32, %c0_i32_0, %arg0 : i32, i32, i32
  }
  func.func @transform_1(%arg0: i32) -> (i32, i32) {
    %c0_i32 = arith.constant 0 : i32
    %c0_i32_0 = arith.constant 0 : i32
    %c0_i32_1 = arith.constant 0 : i32
    return %c0_i32, %c0_i32_0 : i32, i32
  }
  func.func @transform_2(%arg0: i32) -> (i32, i32) {
    %c0_i32 = arith.constant 0 : i32
    %c0_i32_0 = arith.constant 0 : i32
    %c0_i32_1 = arith.constant 0 : i32
    return %c0_i32, %c0_i32_0 : i32, i32
  }
  func.func @transform_3(%arg0: i32) -> (i32, i32) {
    %c0_i32 = arith.constant 0 : i32
    %c0_i32_0 = arith.constant 0 : i32
    %c0_i32_1 = arith.constant 0 : i32
    return %c0_i32, %c0_i32_0 : i32, i32
  }
  func.func @transform_4(%arg0: i32) -> (i32, i32) {
    %c0_i32 = arith.constant 0 : i32
    %c0_i32_0 = arith.constant 0 : i32
    %c0_i32_1 = arith.constant 0 : i32
    return %c0_i32, %c0_i32_0 : i32, i32
  }
  func.func @transform_5(%arg0: i32) -> (i32, i32) {
    %c0_i32 = arith.constant 0 : i32
    %c0_i32_0 = arith.constant 0 : i32
    %c0_i32_1 = arith.constant 0 : i32
    return %c0_i32, %c0_i32_0 : i32, i32
  }
  func.func @transform_6(%arg0: i32) -> (i32, i32) {
    %c0_i32 = arith.constant 0 : i32
    %c0_i32_0 = arith.constant 0 : i32
    %c0_i32_1 = arith.constant 0 : i32
    return %c0_i32, %c0_i32_0 : i32, i32
  }
  func.func @transform_7(%arg0: i32) -> (i32, i32) {
    %c0_i32 = arith.constant 0 : i32
    %c0_i32_0 = arith.constant 0 : i32
    %c0_i32_1 = arith.constant 0 : i32
    return %c0_i32, %c0_i32_0 : i32, i32
  }
  func.func @transform_8(%arg0: i32) -> (i32, i32) {
    %c0_i32 = arith.constant 0 : i32
    %c0_i32_0 = arith.constant 0 : i32
    %c0_i32_1 = arith.constant 0 : i32
    return %c0_i32, %c0_i32_0 : i32, i32
  }
}

</mosaic_0001>

<llo_original>
// kernel: tpu_custom_call.1
$region0: #{tpu_custom_call.1}
  #allocation0 [shape = 'u32[]', space=smem, size = 0x4, offset = 0x4, fixed_abs, tag = 'smem constant byte address 0x4 - core index']
  #allocation1 [shape = 'u32[72,128]{1,0:T(1,128)}', space=vmem, size = 0x9000, scoped, tag = 'internal scratch']
  #allocation2 [shape = 'f32[64,64]{1,0:T(8,128)}', space=vmem, size = 0x8000, scoped, tag = 'scratch operand']
  #allocation3 [shape = 'f32[64,64]{1,0:T(8,128)}', space=vmem, size = 0x8000, scoped, tag = 'scratch operand']
  #allocation4 [shape = 'f32[64,1]{1,0:T(8,128)}', space=vmem, size = 0x8000, scoped, tag = 'scratch operand']
  #allocation5 [shape = 'f32[64,1]{1,0:T(8,128)}', space=vmem, size = 0x8000, scoped, tag = 'scratch operand']
  #allocation6 [shape = 'f32[1,1]{1,0:T(1,128)}', space=vmem, size = 0x200, scoped, tag = 'scratch operand']
  %s0 = inlined_call_operand.vmem [shape: f32[2,4,256], index: 0, kind: input, shape index: {}]
  %s1 = inlined_call_operand.vmem [shape: f32[32,4], index: 1, kind: input, shape index: {}]
  %s2 = inlined_call_operand.vmem [shape: f32[32,1], index: 2, kind: input, shape index: {}]
  %s3 = inlined_call_operand.vmem [shape: f32[32,32], index: 3, kind: input, shape index: {}]
  %s4 = inlined_call_operand.vmem [shape: f32[32,1], index: 4, kind: input, shape index: {}]
  %s5 = inlined_call_operand.vmem [shape: f32[64,1], index: 5, kind: output, shape index: {0}]
  %s6 = inlined_call_operand.vmem [shape: f32[64,1], index: 6, kind: output, shape index: {1}]
  %s7 = inlined_call_operand.hbm [shape: f32[1,1], index: 7, kind: output, shape index: {2}]
  %s8 = inlined_call_operand.hbm [shape: f32[1,1], index: 8, kind: output, shape index: {3}]
  %9 = xla_tuple %s5, %s6, %s7, %s8
  %s10 = sld [smem:[#allocation0]]
  $region62: #{tpu_custom_call.1} parent=0
    _
  %s12 = ssub.s32 1, %s10
  %s13 = scalar_select 0, %s12, %s10
  $region1: #{tpu_custom_call.1} parent=0
    #allocation7 [shape = 'u8[512]{0}', space=smem, size = 0x200, scoped, tag = 'output window, operand 2, single buffered']
    #allocation8 [shape = 's32[1]{0}', space=sflag, size = 0x4, scoped, tag = 'scoped memory for tpu_custom_call.1']
    #allocation9 [shape = 'u8[512]{0}', space=smem, size = 0x200, scoped, tag = 'output window, operand 3, single buffered']
    #allocation10 [shape = 's32[1]{0}', space=sflag, size = 0x4, scoped, tag = 'scoped memory for tpu_custom_call.1']
    %14 = vsyncpa [#allocation8], 0
    %15 = vsyncpa [#allocation10], 0
    // Predicated region
    $region2: #{tpu_custom_call.1} parent=1 // pred_check
      _
    $region3: #{tpu_custom_call.1} parent=1 // pred_check_branch
      %17 = sbr.rel (0) target = $region5
    $region4: #{tpu_custom_call.1} parent=1 // pred_region
      _
    $region5: #{tpu_custom_call.1} parent=1 // pred_fallthru
      _
    // Predicated region
    $region6: #{tpu_custom_call.1} parent=1 // pred_check
      _
    $region7: #{tpu_custom_call.1} parent=1 // pred_check_branch
      %19 = sbr.rel (0) target = $region9
    $region8: #{tpu_custom_call.1} parent=1 // pred_region
      _
    $region9: #{tpu_custom_call.1} parent=1 // pred_fallthru
      _
    // Predicated region
    $region10: #{tpu_custom_call.1} parent=1 // pred_check
      _
    $region11: #{tpu_custom_call.1} parent=1 // pred_check_branch
      %21 = sbr.rel (0) target = $region13
    $region12: #{tpu_custom_call.1} parent=1 // pred_region
      _
    $region13: #{tpu_custom_call.1} parent=1 // pred_fallthru
      _
    // Predicated region
    $region14: #{tpu_custom_call.1} parent=1 // pred_check
      _
    $region15: #{tpu_custom_call.1} parent=1 // pred_check_branch
      %23 = sbr.rel (0) target = $region17
    $region16: #{tpu_custom_call.1} parent=1 // pred_region
      _
    $region17: #{tpu_custom_call.1} parent=1 // pred_fallthru
      _
    // Predicated region
    $region18: #{tpu_custom_call.1} parent=1 // pred_check
      _
    $region19: #{tpu_custom_call.1} parent=1 // pred_check_branch
      %25 = sbr.rel (0) target = $region21
    $region20: #{tpu_custom_call.1} parent=1 // pred_region
      _
    $region21: #{tpu_custom_call.1} parent=1 // pred_fallthru
      _
    %p26 = scmp.eq.s32.totalorder 0, 0
    // Predicated region
    $region22: #{tpu_custom_call.1} parent=1 // pred_check
      %p27 = pneg %p26
    $region23: #{tpu_custom_call.1} parent=1 // pred_check_branch
      %29 = sbr.rel (%p27) target = $region25
    $region24: #{tpu_custom_call.1} parent=1 // pred_region
      %vm30 = vcmask 523264
      %31 = vst.msk [vmem:[#allocation2] sm:$0xff] %vm30, 0.0
      %32 = vst.msk [vmem:[#allocation2 + $0x8] sm:$0xff] %vm30, 0.0
      %33 = vst.msk [vmem:[#allocation2 + $0x10] sm:$0xff] %vm30, 0.0
      %34 = vst.msk [vmem:[#allocation2 + $0x18] sm:$0xff] %vm30, 0.0
      %35 = vst.msk [vmem:[#allocation2 + $0x20] sm:$0xff] %vm30, 0.0
      %36 = vst.msk [vmem:[#allocation2 + $0x28] sm:$0xff] %vm30, 0.0
      %37 = vst.msk [vmem:[#allocation2 + $0x30] sm:$0xff] %vm30, 0.0
      %38 = vst.msk [vmem:[#allocation2 + $0x38] sm:$0xff] %vm30, 0.0
      %39 = vst.msk [vmem:[#allocation3] sm:$0xff] %vm30, 0.0
      %40 = vst.msk [vmem:[#allocation3 + $0x8] sm:$0xff] %vm30, 0.0
      %41 = vst.msk [vmem:[#allocation3 + $0x10] sm:$0xff] %vm30, 0.0
      %42 = vst.msk [vmem:[#allocation3 + $0x18] sm:$0xff] %vm30, 0.0
      %43 = vst.msk [vmem:[#allocation3 + $0x20] sm:$0xff] %vm30, 0.0
      %44 = vst.msk [vmem:[#allocation3 + $0x28] sm:$0xff] %vm30, 0.0
      %45 = vst.msk [vmem:[#allocation3 + $0x30] sm:$0xff] %vm30, 0.0
      %46 = vst.msk [vmem:[#allocation3 + $0x38] sm:$0xff] %vm30, 0.0
      %vm47 = vcmask 7168
      %48 = vst.msk [vmem:[#allocation4] sm:$0xff] %vm47, 0.0
      %49 = vst.msk [vmem:[#allocation4 + $0x8] sm:$0xff] %vm47, 0.0
      %50 = vst.msk [vmem:[#allocation4 + $0x10] sm:$0xff] %vm47, 0.0
      %51 = vst.msk [vmem:[#allocation4 + $0x18] sm:$0xff] %vm47, 0.0
      %52 = vst.msk [vmem:[#allocation4 + $0x20] sm:$0xff] %vm47, 0.0
      %53 = vst.msk [vmem:[#allocation4 + $0x28] sm:$0xff] %vm47, 0.0
      %54 = vst.msk [vmem:[#allocation4 + $0x30] sm:$0xff] %vm47, 0.0
      %55 = vst.msk [vmem:[#allocation4 + $0x38] sm:$0xff] %vm47, 0.0
      %56 = vst.msk [vmem:[#allocation5] sm:$0xff] %vm47, 0.0
      %57 = vst.msk [vmem:[#allocation5 + $0x8] sm:$0xff] %vm47, 0.0
      %58 = vst.msk [vmem:[#allocation5 + $0x10] sm:$0xff] %vm47, 0.0
      %59 = vst.msk [vmem:[#allocation5 + $0x18] sm:$0xff] %vm47, 0.0
      %60 = vst.msk [vmem:[#allocation5 + $0x20] sm:$0xff] %vm47, 0.0
      %61 = vst.msk [vmem:[#allocation5 + $0x28] sm:$0xff] %vm47, 0.0
      %62 = vst.msk [vmem:[#allocation5 + $0x30] sm:$0xff] %vm47, 0.0
      %63 = vst.msk [vmem:[#allocation5 + $0x38] sm:$0xff] %vm47, 0.0
      %vm64 = vcmask 0
      %65 = vst.msk [vmem:[#allocation6] sm:$0x1] %vm64, 0.0
    $region25: #{tpu_custom_call.1} parent=1 // pred_fallthru
      _
    %v66 = vld [vmem:[%s1] sm:$0xff]
    %v67 = vld [vmem:[%s1 + $0x8] sm:$0xff]
    %v68 = vld [vmem:[%s1 + $0x10] sm:$0xff]
    %v69 = vld [vmem:[%s1 + $0x18] sm:$0xff]
    %v70 = vld [vmem:[%s2] sm:$0xff]
    %v71 = vld [vmem:[%s2 + $0x8] sm:$0xff]
    %v72 = vld [vmem:[%s2 + $0x10] sm:$0xff]
    %v73 = vld [vmem:[%s2 + $0x18] sm:$0xff]
    %v74 = vld [vmem:[%s3] sm:$0xff]
    %v75 = vld [vmem:[%s3 + $0x8] sm:$0xff]
    %v76 = vld [vmem:[%s3 + $0x10] sm:$0xff]
    %v77 = vld [vmem:[%s3 + $0x18] sm:$0xff]
    %v78 = vld [vmem:[%s4] sm:$0xff]
    %v79 = vld [vmem:[%s4 + $0x8] sm:$0xff]
    %v80 = vld [vmem:[%s4 + $0x10] sm:$0xff]
    %v81 = vld [vmem:[%s4 + $0x18] sm:$0xff]
    %v82 = vld [vmem:[%s0] sm:$0xff]
    %84 = vset.pattern.permute.xlu0 0
    %85 = vperm.xlu0 %84, %v70
    %v86 = vpop.permute.xlu0 %85
    %89 = vset.pattern.permute.xlu0 0
    %90 = vperm.xlu0 %89, %v71
    %v91 = vpop.permute.xlu0 %90
    %94 = vset.pattern.permute.xlu0 0
    %95 = vperm.xlu0 %94, %v72
    %v96 = vpop.permute.xlu0 %95
    %99 = vset.pattern.permute.xlu0 0
    %100 = vperm.xlu0 %99, %v73
    %v101 = vpop.permute.xlu0 %100
    %104 = vst [vmem:[#allocation1] ss:$2 sm:$0xff] %v82
    %v105 = vld.sshfl [vmem:[#allocation1] sm:$0xff pattern:$0x75316420]
    %v106 = vld.sshfl [vmem:[#allocation1 + $0x8] sm:$0xff pattern:$0x75316420]
    %vm107 = vcmask 31744
    %v109 = vsel %vm107, %v66, 0
    %v112 = vsel %vm107, %v67, 0
    %v115 = vsel %vm107, %v68, 0
    %v118 = vsel %vm107, %v69, 0
    %vm120 = vcmask 1043456
    %v121 = vsel %vm120, %v105, 0
    %v123 = vsel %vm120, %v106, 0
    %125 = vmatpush.msra.mxu0 0.0
    %126 = vmatpush.msra.mxu0 0.0
    %127 = vmatpush.msra.mxu0 0.0
    %128 = vmatpush.msra.mxu0 0.0
    %129 = vmatpush.msra.mxu0 0.0
    %130 = vmatpush.msra.mxu0 0.0
    %131 = vmatpush.msra.mxu0 0.0
    %132 = vmatpush.msra.mxu0 0.0
    %133 = vmatpush.msra.mxu0 0.0
    %134 = vmatpush.msra.mxu0 0.0
    %135 = vmatpush.msra.mxu0 0.0
    %136 = vmatpush.msra.mxu0 0.0
    %137 = vmatpush.msra.mxu0 0.0
    %138 = vmatpush.msra.mxu0 0.0
    %139 = vmatpush.msra.mxu0 0.0
    %140 = vmatpush.msra.mxu0 %v121
    %141 = vmatmul.f32.gmra.mxu0 %v109
    %v142 = vpop.f32.mrf.mxu0
    %v143 = vadd.f32 %v86, %v142
    %144 = vmatmul.f32.gmra.mxu0 %v112
    %v145 = vpop.f32.mrf.mxu0
    %v146 = vadd.f32 %v91, %v145
    %147 = vmatmul.f32.gmra.mxu0 %v115
    %v148 = vpop.f32.mrf.mxu0
    %v149 = vadd.f32 %v96, %v148
    %150 = vmatmul.f32.gmra.mxu0 %v118
    %v151 = vpop.f32.mrf.mxu0
    %v152 = vadd.f32 %v101, %v151
    %153 = vdwg.mxu0
    %154 = vmatpush.msra.mxu0 0.0
    %155 = vmatpush.msra.mxu0 0.0
    %156 = vmatpush.msra.mxu0 0.0
    %157 = vmatpush.msra.mxu0 0.0
    %158 = vmatpush.msra.mxu0 0.0
    %159 = vmatpush.msra.mxu0 0.0
    %160 = vmatpush.msra.mxu0 0.0
    %161 = vmatpush.msra.mxu0 0.0
    %162 = vmatpush.msra.mxu0 0.0
    %163 = vmatpush.msra.mxu0 0.0
    %164 = vmatpush.msra.mxu0 0.0
    %165 = vmatpush.msra.mxu0 0.0
    %166 = vmatpush.msra.mxu0 0.0
    %167 = vmatpush.msra.mxu0 0.0
    %168 = vmatpush.msra.mxu0 0.0
    %169 = vmatpush.msra.mxu0 %v123
    %170 = vmatmul.f32.gmra.mxu0 %v109
    %v171 = vpop.f32.mrf.mxu0
    %v172 = vadd.f32 %v86, %v171
    %173 = vmatmul.f32.gmra.mxu0 %v112
    %v174 = vpop.f32.mrf.mxu0
    %v175 = vadd.f32 %v91, %v174
    %176 = vmatmul.f32.gmra.mxu0 %v115
    %v177 = vpop.f32.mrf.mxu0
    %v178 = vadd.f32 %v96, %v177
    %179 = vmatmul.f32.gmra.mxu0 %v118
    %v180 = vpop.f32.mrf.mxu0
    %v181 = vadd.f32 %v101, %v180
    %182 = vdwg.mxu0
    %184 = vset.pattern.permute.xlu0 0
    %185 = vperm.xlu0 %184, %v78
    %v186 = vpop.permute.xlu0 %185
    %189 = vset.pattern.permute.xlu0 0
    %190 = vperm.xlu0 %189, %v79
    %v191 = vpop.permute.xlu0 %190
    %194 = vset.pattern.permute.xlu0 0
    %195 = vperm.xlu0 %194, %v80
    %v196 = vpop.permute.xlu0 %195
    %199 = vset.pattern.permute.xlu0 0
    %200 = vperm.xlu0 %199, %v81
    %v201 = vpop.permute.xlu0 %200
    %vm203 = vcmask 261120
    %v205 = vsel %vm203, %v74, 0
    %v208 = vsel %vm203, %v75, 0
    %v211 = vsel %vm203, %v76, 0
    %v214 = vsel %vm203, %v77, 0
    %216 = vmatpush.msra.mxu0 0.0
    %217 = vmatpush.msra.mxu0 0.0
    %218 = vmatpush.msra.mxu0 0.0
    %219 = vmatpush.msra.mxu0 0.0
    %220 = vmatpush.msra.mxu0 0.0
    %221 = vmatpush.msra.mxu0 0.0
    %222 = vmatpush.msra.mxu0 0.0
    %223 = vmatpush.msra.mxu0 0.0
    %224 = vmatpush.msra.mxu0 0.0
    %225 = vmatpush.msra.mxu0 0.0
    %226 = vmatpush.msra.mxu0 0.0
    %227 = vmatpush.msra.mxu0 0.0
    %228 = vmatpush.msra.mxu0 %v152
    %229 = vmatpush.msra.mxu0 %v149
    %230 = vmatpush.msra.mxu0 %v146
    %231 = vmatpush.msra.mxu0 %v143
    %232 = vmatmul.f32.gmra.mxu0 %v205
    %v233 = vpop.f32.mrf.mxu0
    %v234 = vadd.f32 %v186, %v233
    %235 = vmatmul.f32.gmra.mxu0 %v208
    %v236 = vpop.f32.mrf.mxu0
    %v237 = vadd.f32 %v191, %v236
    %238 = vmatmul.f32.gmra.mxu0 %v211
    %v239 = vpop.f32.mrf.mxu0
    %v240 = vadd.f32 %v196, %v239
    %241 = vmatmul.f32.gmra.mxu0 %v214
    %v242 = vpop.f32.mrf.mxu0
    %v243 = vadd.f32 %v201, %v242
    %244 = vdwg.mxu0
    %245 = vmatpush.msra.mxu0 0.0
    %246 = vmatpush.msra.mxu0 0.0
    %247 = vmatpush.msra.mxu0 0.0
    %248 = vmatpush.msra.mxu0 0.0
    %249 = vmatpush.msra.mxu0 0.0
    %250 = vmatpush.msra.mxu0 0.0
    %251 = vmatpush.msra.mxu0 0.0
    %252 = vmatpush.msra.mxu0 0.0
    %253 = vmatpush.msra.mxu0 0.0
    %254 = vmatpush.msra.mxu0 0.0
    %255 = vmatpush.msra.mxu0 0.0
    %256 = vmatpush.msra.mxu0 0.0
    %257 = vmatpush.msra.mxu0 %v181
    %258 = vmatpush.msra.mxu0 %v178
    %259 = vmatpush.msra.mxu0 %v175
    %260 = vmatpush.msra.mxu0 %v172
    %261 = vmatmul.f32.gmra.mxu0 %v205
    %v262 = vpop.f32.mrf.mxu0
    %v263 = vadd.f32 %v186, %v262
    %264 = vmatmul.f32.gmra.mxu0 %v208
    %v265 = vpop.f32.mrf.mxu0
    %v266 = vadd.f32 %v191, %v265
    %267 = vmatmul.f32.gmra.mxu0 %v211
    %v268 = vpop.f32.mrf.mxu0
    %v269 = vadd.f32 %v196, %v268
    %270 = vmatmul.f32.gmra.mxu0 %v214
    %v271 = vpop.f32.mrf.mxu0
    %v272 = vadd.f32 %v201, %v271
    %273 = vdwg.mxu0
    %s274 = scalar_lea.vmem %s0, 8
    %v275 = vld [vmem:[%s274] sm:$0xff]
    %277 = vst [vmem:[#allocation1] ss:$2 sm:$0xff] %v275
    %v278 = vld.sshfl [vmem:[#allocation1] sm:$0xff pattern:$0x75316420]
    %v279 = vld.sshfl [vmem:[#allocation1 + $0x8] sm:$0xff pattern:$0x75316420]
    %v280 = vsel %vm120, %v278, 0
    %v282 = vsel %vm120, %v279, 0
    %284 = vmatpush.msra.mxu0 0.0
    %285 = vmatpush.msra.mxu0 0.0
    %286 = vmatpush.msra.mxu0 0.0
    %287 = vmatpush.msra.mxu0 0.0
    %288 = vmatpush.msra.mxu0 0.0
    %289 = vmatpush.msra.mxu0 0.0
    %290 = vmatpush.msra.mxu0 0.0
    %291 = vmatpush.msra.mxu0 0.0
    %292 = vmatpush.msra.mxu0 0.0
    %293 = vmatpush.msra.mxu0 0.0
    %294 = vmatpush.msra.mxu0 0.0
    %295 = vmatpush.msra.mxu0 0.0
    %296 = vmatpush.msra.mxu0 0.0
    %297 = vmatpush.msra.mxu0 0.0
    %298 = vmatpush.msra.mxu0 0.0
    %299 = vmatpush.msra.mxu0 %v280
    %300 = vmatmul.f32.gmra.mxu0 %v109
    %v301 = vpop.f32.mrf.mxu0
    %v302 = vadd.f32 %v86, %v301
    %303 = vmatmul.f32.gmra.mxu0 %v112
    %v304 = vpop.f32.mrf.mxu0
    %v305 = vadd.f32 %v91, %v304
    %306 = vmatmul.f32.gmra.mxu0 %v115
    %v307 = vpop.f32.mrf.mxu0
    %v308 = vadd.f32 %v96, %v307
    %309 = vmatmul.f32.gmra.mxu0 %v118
    %v310 = vpop.f32.mrf.mxu0
    %v311 = vadd.f32 %v101, %v310
    %312 = vdwg.mxu0
    %313 = vmatpush.msra.mxu0 0.0
    %314 = vmatpush.msra.mxu0 0.0
    %315 = vmatpush.msra.mxu0 0.0
    %316 = vmatpush.msra.mxu0 0.0
    %317 = vmatpush.msra.mxu0 0.0
    %318 = vmatpush.msra.mxu0 0.0
    %319 = vmatpush.msra.mxu0 0.0
    %320 = vmatpush.msra.mxu0 0.0
    %321 = vmatpush.msra.mxu0 0.0
    %322 = vmatpush.msra.mxu0 0.0
    %323 = vmatpush.msra.mxu0 0.0
    %324 = vmatpush.msra.mxu0 0.0
    %325 = vmatpush.msra.mxu0 0.0
    %326 = vmatpush.msra.mxu0 0.0
    %327 = vmatpush.msra.mxu0 0.0
    %328 = vmatpush.msra.mxu0 %v282
    %329 = vmatmul.f32.gmra.mxu0 %v109
    %v330 = vpop.f32.mrf.mxu0
    %v331 = vadd.f32 %v86, %v330
    %332 = vmatmul.f32.gmra.mxu0 %v112
    %v333 = vpop.f32.mrf.mxu0
    %v334 = vadd.f32 %v91, %v333
    %335 = vmatmul.f32.gmra.mxu0 %v115
    %v336 = vpop.f32.mrf.mxu0
    %v337 = vadd.f32 %v96, %v336
    %338 = vmatmul.f32.gmra.mxu0 %v118
    %v339 = vpop.f32.mrf.mxu0
    %v340 = vadd.f32 %v101, %v339
    %341 = vdwg.mxu0
    %342 = vmatpush.msra.mxu0 0.0
    %343 = vmatpush.msra.mxu0 0.0
    %344 = vmatpush.msra.mxu0 0.0
    %345 = vmatpush.msra.mxu0 0.0
    %346 = vmatpush.msra.mxu0 0.0
    %347 = vmatpush.msra.mxu0 0.0
    %348 = vmatpush.msra.mxu0 0.0
    %349 = vmatpush.msra.mxu0 0.0
    %350 = vmatpush.msra.mxu0 0.0
    %351 = vmatpush.msra.mxu0 0.0
    %352 = vmatpush.msra.mxu0 0.0
    %353 = vmatpush.msra.mxu0 0.0
    %354 = vmatpush.msra.mxu0 %v311
    %355 = vmatpush.msra.mxu0 %v308
    %356 = vmatpush.msra.mxu0 %v305
    %357 = vmatpush.msra.mxu0 %v302
    %358 = vmatmul.f32.gmra.mxu0 %v205
    %v359 = vpop.f32.mrf.mxu0
    %v360 = vadd.f32 %v186, %v359
    %361 = vmatmul.f32.gmra.mxu0 %v208
    %v362 = vpop.f32.mrf.mxu0
    %v363 = vadd.f32 %v191, %v362
    %364 = vmatmul.f32.gmra.mxu0 %v211
    %v365 = vpop.f32.mrf.mxu0
    %v366 = vadd.f32 %v196, %v365
    %367 = vmatmul.f32.gmra.mxu0 %v214
    %v368 = vpop.f32.mrf.mxu0
    %v369 = vadd.f32 %v201, %v368
    %370 = vdwg.mxu0
    %371 = vmatpush.msra.mxu0 0.0
    %372 = vmatpush.msra.mxu0 0.0
    %373 = vmatpush.msra.mxu0 0.0
    %374 = vmatpush.msra.mxu0 0.0
    %375 = vmatpush.msra.mxu0 0.0
    %376 = vmatpush.msra.mxu0 0.0
    %377 = vmatpush.msra.mxu0 0.0
    %378 = vmatpush.msra.mxu0 0.0
    %379 = vmatpush.msra.mxu0 0.0
    %380 = vmatpush.msra.mxu0 0.0
    %381 = vmatpush.msra.mxu0 0.0
    %382 = vmatpush.msra.mxu0 0.0
    %383 = vmatpush.msra.mxu0 %v340
    %384 = vmatpush.msra.mxu0 %v337
    %385 = vmatpush.msra.mxu0 %v334
    %386 = vmatpush.msra.mxu0 %v331
    %387 = vmatmul.f32.gmra.mxu0 %v205
    %v388 = vpop.f32.mrf.mxu0
    %v389 = vadd.f32 %v186, %v388
    %390 = vmatmul.f32.gmra.mxu0 %v208
    %v391 = vpop.f32.mrf.mxu0
    %v392 = vadd.f32 %v191, %v391
    %393 = vmatmul.f32.gmra.mxu0 %v211
    %v394 = vpop.f32.mrf.mxu0
    %v395 = vadd.f32 %v196, %v394
    %396 = vmatmul.f32.gmra.mxu0 %v214
    %v397 = vpop.f32.mrf.mxu0
    %v398 = vadd.f32 %v201, %v397
    %399 = vdwg.mxu0
    %v400 = vld [vmem:[#allocation4] sm:$0xff]
    %v401 = vld [vmem:[#allocation4 + $0x8] sm:$0xff]
    %v402 = vld [vmem:[#allocation4 + $0x10] sm:$0xff]
    %v403 = vld [vmem:[#allocation4 + $0x18] sm:$0xff]
    %v404 = vld [vmem:[#allocation4 + $0x20] sm:$0xff]
    %v405 = vld [vmem:[#allocation4 + $0x28] sm:$0xff]
    %v406 = vld [vmem:[#allocation4 + $0x30] sm:$0xff]
    %v407 = vld [vmem:[#allocation4 + $0x38] sm:$0xff]
    %v408 = vadd.f32 %v143, %v172
    %409 = vadd.xlane.f32.xlu0 %v408
    %v410 = vpop.xlane.xlu0 %409
    %v411 = vadd.f32 %v146, %v175
    %412 = vadd.xlane.f32.xlu0 %v411
    %v413 = vpop.xlane.xlu0 %412
    %v414 = vadd.f32 %v149, %v178
    %415 = vadd.xlane.f32.xlu0 %v414
    %v416 = vpop.xlane.xlu0 %415
    %v417 = vadd.f32 %v152, %v181
    %418 = vadd.xlane.f32.xlu0 %v417
    %v419 = vpop.xlane.xlu0 %418
    %v420 = vadd.f32 %v302, %v331
    %421 = vadd.xlane.f32.xlu0 %v420
    %v422 = vpop.xlane.xlu0 %421
    %v423 = vadd.f32 %v305, %v334
    %424 = vadd.xlane.f32.xlu0 %v423
    %v425 = vpop.xlane.xlu0 %424
    %v426 = vadd.f32 %v308, %v337
    %427 = vadd.xlane.f32.xlu0 %v426
    %v428 = vpop.xlane.xlu0 %427
    %v429 = vadd.f32 %v311, %v340
    %430 = vadd.xlane.f32.xlu0 %v429
    %v431 = vpop.xlane.xlu0 %430
    %v432 = vadd.f32 %v400, %v410
    %v433 = vadd.f32 %v401, %v413
    %v434 = vadd.f32 %v402, %v416
    %v435 = vadd.f32 %v403, %v419
    %v436 = vadd.f32 %v404, %v422
    %v437 = vadd.f32 %v405, %v425
    %v438 = vadd.f32 %v406, %v428
    %v439 = vadd.f32 %v407, %v431
    %vm440 = vcmask 7168
    %441 = vst.msk [vmem:[#allocation4] sm:$0xff] %vm440, %v432
    %442 = vst.msk [vmem:[#allocation4 + $0x8] sm:$0xff] %vm440, %v433
    %443 = vst.msk [vmem:[#allocation4 + $0x10] sm:$0xff] %vm440, %v434
    %444 = vst.msk [vmem:[#allocation4 + $0x18] sm:$0xff] %vm440, %v435
    %445 = vst.msk [vmem:[#allocation4 + $0x20] sm:$0xff] %vm440, %v436
    %446 = vst.msk [vmem:[#allocation4 + $0x28] sm:$0xff] %vm440, %v437
    %447 = vst.msk [vmem:[#allocation4 + $0x30] sm:$0xff] %vm440, %v438
    %448 = vst.msk [vmem:[#allocation4 + $0x38] sm:$0xff] %vm440, %v439
    %v449 = vld [vmem:[#allocation5] sm:$0xff]
    %v450 = vld [vmem:[#allocation5 + $0x8] sm:$0xff]
    %v451 = vld [vmem:[#allocation5 + $0x10] sm:$0xff]
    %v452 = vld [vmem:[#allocation5 + $0x18] sm:$0xff]
    %v453 = vld [vmem:[#allocation5 + $0x20] sm:$0xff]
    %v454 = vld [vmem:[#allocation5 + $0x28] sm:$0xff]
    %v455 = vld [vmem:[#allocation5 + $0x30] sm:$0xff]
    %v456 = vld [vmem:[#allocation5 + $0x38] sm:$0xff]
    %v457 = vadd.f32 %v234, %v263
    %458 = vadd.xlane.f32.xlu0 %v457
    %v459 = vpop.xlane.xlu0 %458
    %v460 = vadd.f32 %v237, %v266
    %461 = vadd.xlane.f32.xlu0 %v460
    %v462 = vpop.xlane.xlu0 %461
    %v463 = vadd.f32 %v240, %v269
    %464 = vadd.xlane.f32.xlu0 %v463
    %v465 = vpop.xlane.xlu0 %464
    %v466 = vadd.f32 %v243, %v272
    %467 = vadd.xlane.f32.xlu0 %v466
    %v468 = vpop.xlane.xlu0 %467
    %v469 = vadd.f32 %v360, %v389
    %470 = vadd.xlane.f32.xlu0 %v469
    %v471 = vpop.xlane.xlu0 %470
    %v472 = vadd.f32 %v363, %v392
    %473 = vadd.xlane.f32.xlu0 %v472
    %v474 = vpop.xlane.xlu0 %473
    %v475 = vadd.f32 %v366, %v395
    %476 = vadd.xlane.f32.xlu0 %v475
    %v477 = vpop.xlane.xlu0 %476
    %v478 = vadd.f32 %v369, %v398
    %479 = vadd.xlane.f32.xlu0 %v478
    %v480 = vpop.xlane.xlu0 %479
    %v481 = vadd.f32 %v449, %v459
    %v482 = vadd.f32 %v450, %v462
    %v483 = vadd.f32 %v451, %v465
    %v484 = vadd.f32 %v452, %v468
    %v485 = vadd.f32 %v453, %v471
    %v486 = vadd.f32 %v454, %v474
    %v487 = vadd.f32 %v455, %v477
    %v488 = vadd.f32 %v456, %v480
    %489 = vst.msk [vmem:[#allocation5] sm:$0xff] %vm440, %v481
    %490 = vst.msk [vmem:[#allocation5 + $0x8] sm:$0xff] %vm440, %v482
    %491 = vst.msk [vmem:[#allocation5 + $0x10] sm:$0xff] %vm440, %v483
    %492 = vst.msk [vmem:[#allocation5 + $0x18] sm:$0xff] %vm440, %v484
    %493 = vst.msk [vmem:[#allocation5 + $0x20] sm:$0xff] %vm440, %v485
    %494 = vst.msk [vmem:[#allocation5 + $0x28] sm:$0xff] %vm440, %v486
    %495 = vst.msk [vmem:[#allocation5 + $0x30] sm:$0xff] %vm440, %v487
    %496 = vst.msk [vmem:[#allocation5 + $0x38] sm:$0xff] %vm440, %v488
    %v497 = vsub.f32 %v234, %v143
    %v498 = vsub.f32 %v263, %v172
    %v499 = vsub.f32 %v237, %v146
    %v500 = vsub.f32 %v266, %v175
    %v501 = vsub.f32 %v240, %v149
    %v502 = vsub.f32 %v269, %v178
    %v503 = vsub.f32 %v243, %v152
    %v504 = vsub.f32 %v272, %v181
    %v505 = vsub.f32 %v360, %v302
    %v506 = vsub.f32 %v389, %v331
    %v507 = vsub.f32 %v363, %v305
    %v508 = vsub.f32 %v392, %v334
    %v509 = vsub.f32 %v366, %v308
    %v510 = vsub.f32 %v395, %v337
    %v511 = vsub.f32 %v369, %v311
    %v512 = vsub.f32 %v398, %v340
    %v513 = vld [vmem:[#allocation6] sm:$0x1]
    %v514 = vmul.f32 %v497, %v497
    %v515 = vmul.f32 %v498, %v498
    %v516 = vmul.f32 %v499, %v499
    %v517 = vmul.f32 %v500, %v500
    %v518 = vmul.f32 %v501, %v501
    %v519 = vmul.f32 %v502, %v502
    %v520 = vmul.f32 %v503, %v503
    %v521 = vmul.f32 %v504, %v504
    %v522 = vmul.f32 %v505, %v505
    %v523 = vmul.f32 %v506, %v506
    %v524 = vmul.f32 %v507, %v507
    %v525 = vmul.f32 %v508, %v508
    %v526 = vmul.f32 %v509, %v509
    %v527 = vmul.f32 %v510, %v510
    %v528 = vmul.f32 %v511, %v511
    %v529 = vmul.f32 %v512, %v512
    %v530 = vadd.f32 %v514, %v515
    %v531 = vadd.f32 %v530, %v516
    %v532 = vadd.f32 %v531, %v517
    %v533 = vadd.f32 %v532, %v518
    %v534 = vadd.f32 %v533, %v519
    %v535 = vadd.f32 %v534, %v520
    %v536 = vadd.f32 %v535, %v521
    %v537 = vadd.f32 %v536, %v522
    %v538 = vadd.f32 %v537, %v523
    %v539 = vadd.f32 %v538, %v524
    %v540 = vadd.f32 %v539, %v525
    %v541 = vadd.f32 %v540, %v526
    %v542 = vadd.f32 %v541, %v527
    %v543 = vadd.f32 %v542, %v528
    %v544 = vadd.f32 %v543, %v529
    %545 = vadd.xlane.f32.xlu0 %v544
    %v546 = vpop.xlane.xlu0 %545
    %v547 = vrot.slane %v546, 4
    %v548 = vadd.f32 %v546, %v547
    %v549 = vrot.slane %v548, 2
    %v550 = vadd.f32 %v548, %v549
    %v551 = vrot.slane %v550, 1
    %v552 = vadd.f32 %v550, %v551
    %s553 = vtos %v552
    %v554 = vstv %s553
    %v555 = vadd.f32 %v513, %v554
    %vm556 = vcmask 0
    %557 = vst.msk [vmem:[#allocation6] sm:$0x1] %vm556, %v555
    %v558 = vld [vmem:[#allocation2] sm:$0xff]
    %v559 = vld [vmem:[#allocation2 + $0x8] sm:$0xff]
    %v560 = vld [vmem:[#allocation2 + $0x10] sm:$0xff]
    %v561 = vld [vmem:[#allocation2 + $0x18] sm:$0xff]
    %v562 = vld [vmem:[#allocation2 + $0x20] sm:$0xff]
    %v563 = vld [vmem:[#allocation2 + $0x28] sm:$0xff]
    %v564 = vld [vmem:[#allocation2 + $0x30] sm:$0xff]
    %v565 = vld [vmem:[#allocation2 + $0x38] sm:$0xff]
    %566 = vmatpush.xpose.msra.mxu0 0.0
    %567 = vmatpush.xpose.msra.mxu0 0.0
    %568 = vmatpush.xpose.msra.mxu0 0.0
    %569 = vmatpush.xpose.msra.mxu0 0.0
    %570 = vmatpush.xpose.msra.mxu0 0.0
    %571 = vmatpush.xpose.msra.mxu0 0.0
    %572 = vmatpush.xpose.msra.mxu0 0.0
    %573 = vmatpush.xpose.msra.mxu0 0.0
    %574 = vmatpush.xpose.msra.mxu0 %v311
    %575 = vmatpush.xpose.msra.mxu0 %v308
    %576 = vmatpush.xpose.msra.mxu0 %v305
    %577 = vmatpush.xpose.msra.mxu0 %v302
    %578 = vmatpush.xpose.msra.mxu0 %v152
    %579 = vmatpush.xpose.msra.mxu0 %v149
    %580 = vmatpush.xpose.msra.mxu0 %v146
    %581 = vmatpush.xpose.msra.mxu0 %v143
    %582 = vmatmul.f32.gmra.mxu0 %v143
    %v583 = vpop.f32.mrf.mxu0
    %v584 = vadd.f32 0.0, %v583
    %585 = vmatmul.f32.gmra.mxu0 %v146
    %v586 = vpop.f32.mrf.mxu0
    %v587 = vadd.f32 0.0, %v586
    %588 = vmatmul.f32.gmra.mxu0 %v149
    %v589 = vpop.f32.mrf.mxu0
    %v590 = vadd.f32 0.0, %v589
    %591 = vmatmul.f32.gmra.mxu0 %v152
    %v592 = vpop.f32.mrf.mxu0
    %v593 = vadd.f32 0.0, %v592
    %594 = vmatmul.f32.gmra.mxu0 %v302
    %v595 = vpop.f32.mrf.mxu0
    %v596 = vadd.f32 0.0, %v595
    %597 = vmatmul.f32.gmra.mxu0 %v305
    %v598 = vpop.f32.mrf.mxu0
    %v599 = vadd.f32 0.0, %v598
    %600 = vmatmul.f32.gmra.mxu0 %v308
    %v601 = vpop.f32.mrf.mxu0
    %v602 = vadd.f32 0.0, %v601
    %603 = vmatmul.f32.gmra.mxu0 %v311
    %v604 = vpop.f32.mrf.mxu0
    %v605 = vadd.f32 0.0, %v604
    %606 = vdwg.mxu0
    %607 = vmatpush.xpose.msra.mxu0 0.0
    %608 = vmatpush.xpose.msra.mxu0 0.0
    %609 = vmatpush.xpose.msra.mxu0 0.0
    %610 = vmatpush.xpose.msra.mxu0 0.0
    %611 = vmatpush.xpose.msra.mxu0 0.0
    %612 = vmatpush.xpose.msra.mxu0 0.0
    %613 = vmatpush.xpose.msra.mxu0 0.0
    %614 = vmatpush.xpose.msra.mxu0 0.0
    %615 = vmatpush.xpose.msra.mxu0 %v340
    %616 = vmatpush.xpose.msra.mxu0 %v337
    %617 = vmatpush.xpose.msra.mxu0 %v334
    %618 = vmatpush.xpose.msra.mxu0 %v331
    %619 = vmatpush.xpose.msra.mxu0 %v181
    %620 = vmatpush.xpose.msra.mxu0 %v178
    %621 = vmatpush.xpose.msra.mxu0 %v175
    %622 = vmatpush.xpose.msra.mxu0 %v172
    %623 = vmatmul.f32.gmra.mxu0 %v172
    %v624 = vpop.f32.mrf.mxu0
    %v625 = vadd.f32 %v584, %v624
    %626 = vmatmul.f32.gmra.mxu0 %v175
    %v627 = vpop.f32.mrf.mxu0
    %v628 = vadd.f32 %v587, %v627
    %629 = vmatmul.f32.gmra.mxu0 %v178
    %v630 = vpop.f32.mrf.mxu0
    %v631 = vadd.f32 %v590, %v630
    %632 = vmatmul.f32.gmra.mxu0 %v181
    %v633 = vpop.f32.mrf.mxu0
    %v634 = vadd.f32 %v593, %v633
    %635 = vmatmul.f32.gmra.mxu0 %v331
    %v636 = vpop.f32.mrf.mxu0
    %v637 = vadd.f32 %v596, %v636
    %638 = vmatmul.f32.gmra.mxu0 %v334
    %v639 = vpop.f32.mrf.mxu0
    %v640 = vadd.f32 %v599, %v639
    %641 = vmatmul.f32.gmra.mxu0 %v337
    %v642 = vpop.f32.mrf.mxu0
    %v643 = vadd.f32 %v602, %v642
    %644 = vmatmul.f32.gmra.mxu0 %v340
    %v645 = vpop.f32.mrf.mxu0
    %v646 = vadd.f32 %v605, %v645
    %647 = vdwg.mxu0
    %v648 = vadd.f32 %v558, %v625
    %v649 = vadd.f32 %v559, %v628
    %v650 = vadd.f32 %v560, %v631
    %v651 = vadd.f32 %v561, %v634
    %v652 = vadd.f32 %v562, %v637
    %v653 = vadd.f32 %v563, %v640
    %v654 = vadd.f32 %v564, %v643
    %v655 = vadd.f32 %v565, %v646
    %vm656 = vcmask 523264
    %657 = vst.msk [vmem:[#allocation2] sm:$0xff] %vm656, %v648
    %658 = vst.msk [vmem:[#allocation2 + $0x8] sm:$0xff] %vm656, %v649
    %659 = vst.msk [vmem:[#allocation2 + $0x10] sm:$0xff] %vm656, %v650
    %660 = vst.msk [vmem:[#allocation2 + $0x18] sm:$0xff] %vm656, %v651
    %661 = vst.msk [vmem:[#allocation2 + $0x20] sm:$0xff] %vm656, %v652
    %662 = vst.msk [vmem:[#allocation2 + $0x28] sm:$0xff] %vm656, %v653
    %663 = vst.msk [vmem:[#allocation2 + $0x30] sm:$0xff] %vm656, %v654
    %664 = vst.msk [vmem:[#allocation2 + $0x38] sm:$0xff] %vm656, %v655
    %v665 = vld [vmem:[#allocation3] sm:$0xff]
    %v666 = vld [vmem:[#allocation3 + $0x8] sm:$0xff]
    %v667 = vld [vmem:[#allocation3 + $0x10] sm:$0xff]
    %v668 = vld [vmem:[#allocation3 + $0x18] sm:$0xff]
    %v669 = vld [vmem:[#allocation3 + $0x20] sm:$0xff]
    %v670 = vld [vmem:[#allocation3 + $0x28] sm:$0xff]
    %v671 = vld [vmem:[#allocation3 + $0x30] sm:$0xff]
    %v672 = vld [vmem:[#allocation3 + $0x38] sm:$0xff]
    %673 = vmatpush.xpose.msra.mxu0 0.0
    %674 = vmatpush.xpose.msra.mxu0 0.0
    %675 = vmatpush.xpose.msra.mxu0 0.0
    %676 = vmatpush.xpose.msra.mxu0 0.0
    %677 = vmatpush.xpose.msra.mxu0 0.0
    %678 = vmatpush.xpose.msra.mxu0 0.0
    %679 = vmatpush.xpose.msra.mxu0 0.0
    %680 = vmatpush.xpose.msra.mxu0 0.0
    %681 = vmatpush.xpose.msra.mxu0 %v369
    %682 = vmatpush.xpose.msra.mxu0 %v366
    %683 = vmatpush.xpose.msra.mxu0 %v363
    %684 = vmatpush.xpose.msra.mxu0 %v360
    %685 = vmatpush.xpose.msra.mxu0 %v243
    %686 = vmatpush.xpose.msra.mxu0 %v240
    %687 = vmatpush.xpose.msra.mxu0 %v237
    %688 = vmatpush.xpose.msra.mxu0 %v234
    %689 = vmatmul.f32.gmra.mxu0 %v234
    %v690 = vpop.f32.mrf.mxu0
    %v691 = vadd.f32 0.0, %v690
    %692 = vmatmul.f32.gmra.mxu0 %v237
    %v693 = vpop.f32.mrf.mxu0
    %v694 = vadd.f32 0.0, %v693
    %695 = vmatmul.f32.gmra.mxu0 %v240
    %v696 = vpop.f32.mrf.mxu0
    %v697 = vadd.f32 0.0, %v696
    %698 = vmatmul.f32.gmra.mxu0 %v243
    %v699 = vpop.f32.mrf.mxu0
    %v700 = vadd.f32 0.0, %v699
    %701 = vmatmul.f32.gmra.mxu0 %v360
    %v702 = vpop.f32.mrf.mxu0
    %v703 = vadd.f32 0.0, %v702
    %704 = vmatmul.f32.gmra.mxu0 %v363
    %v705 = vpop.f32.mrf.mxu0
    %v706 = vadd.f32 0.0, %v705
    %707 = vmatmul.f32.gmra.mxu0 %v366
    %v708 = vpop.f32.mrf.mxu0
    %v709 = vadd.f32 0.0, %v708
    %710 = vmatmul.f32.gmra.mxu0 %v369
    %v711 = vpop.f32.mrf.mxu0
    %v712 = vadd.f32 0.0, %v711
    %713 = vdwg.mxu0
    %714 = vmatpush.xpose.msra.mxu0 0.0
    %715 = vmatpush.xpose.msra.mxu0 0.0
    %716 = vmatpush.xpose.msra.mxu0 0.0
    %717 = vmatpush.xpose.msra.mxu0 0.0
    %718 = vmatpush.xpose.msra.mxu0 0.0
    %719 = vmatpush.xpose.msra.mxu0 0.0
    %720 = vmatpush.xpose.msra.mxu0 0.0
    %721 = vmatpush.xpose.msra.mxu0 0.0
    %722 = vmatpush.xpose.msra.mxu0 %v398
    %723 = vmatpush.xpose.msra.mxu0 %v395
    %724 = vmatpush.xpose.msra.mxu0 %v392
    %725 = vmatpush.xpose.msra.mxu0 %v389
    %726 = vmatpush.xpose.msra.mxu0 %v272
    %727 = vmatpush.xpose.msra.mxu0 %v269
    %728 = vmatpush.xpose.msra.mxu0 %v266
    %729 = vmatpush.xpose.msra.mxu0 %v263
    %730 = vmatmul.f32.gmra.mxu0 %v263
    %v731 = vpop.f32.mrf.mxu0
    %v732 = vadd.f32 %v691, %v731
    %733 = vmatmul.f32.gmra.mxu0 %v266
    %v734 = vpop.f32.mrf.mxu0
    %v735 = vadd.f32 %v694, %v734
    %736 = vmatmul.f32.gmra.mxu0 %v269
    %v737 = vpop.f32.mrf.mxu0
    %v738 = vadd.f32 %v697, %v737
    %739 = vmatmul.f32.gmra.mxu0 %v272
    %v740 = vpop.f32.mrf.mxu0
    %v741 = vadd.f32 %v700, %v740
    %742 = vmatmul.f32.gmra.mxu0 %v389
    %v743 = vpop.f32.mrf.mxu0
    %v744 = vadd.f32 %v703, %v743
    %745 = vmatmul.f32.gmra.mxu0 %v392
    %v746 = vpop.f32.mrf.mxu0
    %v747 = vadd.f32 %v706, %v746
    %748 = vmatmul.f32.gmra.mxu0 %v395
    %v749 = vpop.f32.mrf.mxu0
    %v750 = vadd.f32 %v709, %v749
    %751 = vmatmul.f32.gmra.mxu0 %v398
    %v752 = vpop.f32.mrf.mxu0
    %v753 = vadd.f32 %v712, %v752
    %754 = vdwg.mxu0
    %v755 = vadd.f32 %v665, %v732
    %v756 = vadd.f32 %v666, %v735
    %v757 = vadd.f32 %v667, %v738
    %v758 = vadd.f32 %v668, %v741
    %v759 = vadd.f32 %v669, %v744
    %v760 = vadd.f32 %v670, %v747
    %v761 = vadd.f32 %v671, %v750
    %v762 = vadd.f32 %v672, %v753
    %763 = vst.msk [vmem:[#allocation3] sm:$0xff] %vm656, %v755
    %764 = vst.msk [vmem:[#allocation3 + $0x8] sm:$0xff] %vm656, %v756
    %765 = vst.msk [vmem:[#allocation3 + $0x10] sm:$0xff] %vm656, %v757
    %766 = vst.msk [vmem:[#allocation3 + $0x18] sm:$0xff] %vm656, %v758
    %767 = vst.msk [vmem:[#allocation3 + $0x20] sm:$0xff] %vm656, %v759
    %768 = vst.msk [vmem:[#allocation3 + $0x28] sm:$0xff] %vm656, %v760
    %769 = vst.msk [vmem:[#allocation3 + $0x30] sm:$0xff] %vm656, %v761
    %770 = vst.msk [vmem:[#allocation3 + $0x38] sm:$0xff] %vm656, %v762
    // Predicated region
    $region26: #{tpu_custom_call.1} parent=1 // pred_check
      %p771 = pneg %p26
    $region27: #{tpu_custom_call.1} parent=1 // pred_check_branch
      %773 = sbr.rel (%p771) target = $region29
    $region28: #{tpu_custom_call.1} parent=1 // pred_region
      %v774 = vld [vmem:[#allocation4] sm:$0xff]
      %v775 = vld [vmem:[#allocation4 + $0x8] sm:$0xff]
      %v776 = vld [vmem:[#allocation4 + $0x10] sm:$0xff]
      %v777 = vld [vmem:[#allocation4 + $0x18] sm:$0xff]
      %v778 = vld [vmem:[#allocation4 + $0x20] sm:$0xff]
      %v779 = vld [vmem:[#allocation4 + $0x28] sm:$0xff]
      %v780 = vld [vmem:[#allocation4 + $0x30] sm:$0xff]
      %v781 = vld [vmem:[#allocation4 + $0x38] sm:$0xff]
      %782 = vst.msk [vmem:[%s5] sm:$0xff] %vm440, %v774
      %783 = vst.msk [vmem:[%s5 + $0x8] sm:$0xff] %vm440, %v775
      %784 = vst.msk [vmem:[%s5 + $0x10] sm:$0xff] %vm440, %v776
      %785 = vst.msk [vmem:[%s5 + $0x18] sm:$0xff] %vm440, %v777
      %786 = vst.msk [vmem:[%s5 + $0x20] sm:$0xff] %vm440, %v778
      %787 = vst.msk [vmem:[%s5 + $0x28] sm:$0xff] %vm440, %v779
      %788 = vst.msk [vmem:[%s5 + $0x30] sm:$0xff] %vm440, %v780
      %789 = vst.msk [vmem:[%s5 + $0x38] sm:$0xff] %vm440, %v781
      %v790 = vld [vmem:[#allocation5] sm:$0xff]
      %v791 = vld [vmem:[#allocation5 + $0x8] sm:$0xff]
      %v792 = vld [vmem:[#allocation5 + $0x10] sm:$0xff]
      %v793 = vld [vmem:[#allocation5 + $0x18] sm:$0xff]
      %v794 = vld [vmem:[#allocation5 + $0x20] sm:$0xff]
      %v795 = vld [vmem:[#allocation5 + $0x28] sm:$0xff]
      %v796 = vld [vmem:[#allocation5 + $0x30] sm:$0xff]
      %v797 = vld [vmem:[#allocation5 + $0x38] sm:$0xff]
      %798 = vst.msk [vmem:[%s6] sm:$0xff] %vm440, %v790
      %799 = vst.msk [vmem:[%s6 + $0x8] sm:$0xff] %vm440, %v791
      %800 = vst.msk [vmem:[%s6 + $0x10] sm:$0xff] %vm440, %v792
      %801 = vst.msk [vmem:[%s6 + $0x18] sm:$0xff] %vm440, %v793
      %802 = vst.msk [vmem:[%s6 + $0x20] sm:$0xff] %vm440, %v794
      %803 = vst.msk [vmem:[%s6 + $0x28] sm:$0xff] %vm440, %v795
      %804 = vst.msk [vmem:[%s6 + $0x30] sm:$0xff] %vm440, %v796
      %805 = vst.msk [vmem:[%s6 + $0x38] sm:$0xff] %vm440, %v797
      %v806 = vld [vmem:[#allocation6] sm:$0x1]
      %v807 = vadd.f32 %v806, 0.0
      %s808 = vtos %v807
      %s809 = smul.f32 %s808, 6.1035156e-05
      %s810 = scalar_lea.smem [#allocation7], 0
      %811 = sst [smem:[%s810]] %s809
      %v812 = vld [vmem:[#allocation3] sm:$0xff]
      %v813 = vld [vmem:[#allocation3 + $0x8] sm:$0xff]
      %v814 = vld [vmem:[#allocation3 + $0x10] sm:$0xff]
      %v815 = vld [vmem:[#allocation3 + $0x18] sm:$0xff]
      %v816 = vld [vmem:[#allocation3 + $0x20] sm:$0xff]
      %v817 = vld [vmem:[#allocation3 + $0x28] sm:$0xff]
      %v818 = vld [vmem:[#allocation3 + $0x30] sm:$0xff]
      %v819 = vld [vmem:[#allocation3 + $0x38] sm:$0xff]
      %v820 = vld [vmem:[#allocation2] sm:$0xff]
      %v821 = vld [vmem:[#allocation2 + $0x8] sm:$0xff]
      %v822 = vld [vmem:[#allocation2 + $0x10] sm:$0xff]
      %v823 = vld [vmem:[#allocation2 + $0x18] sm:$0xff]
      %v824 = vld [vmem:[#allocation2 + $0x20] sm:$0xff]
      %v825 = vld [vmem:[#allocation2 + $0x28] sm:$0xff]
      %v826 = vld [vmem:[#allocation2 + $0x30] sm:$0xff]
      %v827 = vld [vmem:[#allocation2 + $0x38] sm:$0xff]
      %v828 = vsub.f32 %v812, %v820
      %v829 = vsub.f32 %v813, %v821
      %v830 = vsub.f32 %v814, %v822
      %v831 = vsub.f32 %v815, %v823
      %v832 = vsub.f32 %v816, %v824
      %v833 = vsub.f32 %v817, %v825
      %v834 = vsub.f32 %v818, %v826
      %v835 = vsub.f32 %v819, %v827
      %v836 = vmul.f32 %v828, 6.1035156e-05
      %v837 = vmul.f32 %v829, 6.1035156e-05
      %v838 = vmul.f32 %v830, 6.1035156e-05
      %v839 = vmul.f32 %v831, 6.1035156e-05
      %v840 = vmul.f32 %v832, 6.1035156e-05
      %v841 = vmul.f32 %v833, 6.1035156e-05
      %v842 = vmul.f32 %v834, 6.1035156e-05
      %v843 = vmul.f32 %v835, 6.1035156e-05
      %v844 = vmul.f32 %v836, %v836
      %v845 = vmul.f32 %v837, %v837
      %v846 = vmul.f32 %v838, %v838
      %v847 = vmul.f32 %v839, %v839
      %v848 = vmul.f32 %v840, %v840
      %v849 = vmul.f32 %v841, %v841
      %v850 = vmul.f32 %v842, %v842
      %v851 = vmul.f32 %v843, %v843
      %v852 = vsel %vm656, %v844, 0.0
      %v853 = vsel %vm656, %v845, 0.0
      %v854 = vadd.f32 %v852, %v853
      %v855 = vsel %vm656, %v846, 0.0
      %v856 = vadd.f32 %v854, %v855
      %v857 = vsel %vm656, %v847, 0.0
      %v858 = vadd.f32 %v856, %v857
      %v859 = vsel %vm656, %v848, 0.0
      %v860 = vadd.f32 %v858, %v859
      %v861 = vsel %vm656, %v849, 0.0
      %v862 = vadd.f32 %v860, %v861
      %v863 = vsel %vm656, %v850, 0.0
      %v864 = vadd.f32 %v862, %v863
      %v865 = vsel %vm656, %v851, 0.0
      %v866 = vadd.f32 %v864, %v865
      %867 = vadd.xlane.f32.xlu0 %v866
      %v868 = vpop.xlane.xlu0 %867
      %v869 = vrot.slane %v868, 4
      %v870 = vadd.f32 %v868, %v869
      %v871 = vrot.slane %v870, 2
      %v872 = vadd.f32 %v870, %v871
      %v873 = vrot.slane %v872, 1
      %v874 = vadd.f32 %v872, %v873
      %s875 = vtos %v874
      %s876 = smul.f32 %s875, 0.00024414063
      %s877 = scalar_lea.smem [#allocation9], 0
      %878 = sst [smem:[%s877]] %s876
    $region29: #{tpu_custom_call.1} parent=1 // pred_fallthru
      _
    // Predicated region
    $region30: #{tpu_custom_call.1} parent=1 // pred_check
      _
    $region31: #{tpu_custom_call.1} parent=1 // pred_check_branch
      %880 = sbr.rel (0) target = $region33
    $region32: #{tpu_custom_call.1} parent=1 // pred_region
      _
    $region33: #{tpu_custom_call.1} parent=1 // pred_fallthru
      _
    // Predicated region
    $region34: #{tpu_custom_call.1} parent=1 // pred_check
      _
    $region35: #{tpu_custom_call.1} parent=1 // pred_check_branch
      %882 = sbr.rel (0) target = $region37
    $region36: #{tpu_custom_call.1} parent=1 // pred_region
      _
    $region37: #{tpu_custom_call.1} parent=1 // pred_fallthru
      _
    // Predicated region
    $region38: #{tpu_custom_call.1} parent=1 // pred_check
      _
    $region39: #{tpu_custom_call.1} parent=1 // pred_check_branch
      %884 = sbr.rel (0) target = $region41
    $region40: #{tpu_custom_call.1} parent=1 // pred_region
      %886 = vsyncadd [#allocation8], 0
      %s888 = sshll.u32 %s7, 4
      %s889 = int_to_ptr.hbm [resolvable:$true] %s888
      %891 = dma.smem_to_hbm [#allocation7], 16, %s889, [#allocation8]
    $region41: #{tpu_custom_call.1} parent=1 // pred_fallthru
      _
    // Predicated region
    $region42: #{tpu_custom_call.1} parent=1 // pred_check
      _
    $region43: #{tpu_custom_call.1} parent=1 // pred_check_branch
      %893 = sbr.rel (0) target = $region45
    $region44: #{tpu_custom_call.1} parent=1 // pred_region
      %895 = vsyncadd [#allocation10], 0
      %s897 = sshll.u32 %s8, 4
      %s898 = int_to_ptr.hbm [resolvable:$true] %s897
      %900 = dma.smem_to_hbm [#allocation9], 16, %s898, [#allocation10]
    $region45: #{tpu_custom_call.1} parent=1 // pred_fallthru
      _
    // Predicated region
    $region46: #{tpu_custom_call.1} parent=1 // pred_check
      _
    $region47: #{tpu_custom_call.1} parent=1 // pred_check_branch
      %902 = sbr.rel (0) target = $region49
    $region48: #{tpu_custom_call.1} parent=1 // pred_region
      _
    $region49: #{tpu_custom_call.1} parent=1 // pred_fallthru
      _
    // Predicated region
    $region50: #{tpu_custom_call.1} parent=1 // pred_check
      _
    $region51: #{tpu_custom_call.1} parent=1 // pred_check_branch
      %904 = sbr.rel (0) target = $region53
    $region52: #{tpu_custom_call.1} parent=1 // pred_region
      _
    $region53: #{tpu_custom_call.1} parent=1 // pred_fallthru
      _
    // Predicated region
    $region54: #{tpu_custom_call.1} parent=1 // pred_check
      _
    $region55: #{tpu_custom_call.1} parent=1 // pred_check_branch
      %906 = sbr.rel (0) target = $region57
    $region56: #{tpu_custom_call.1} parent=1 // pred_region
      %908 = dma.done [#allocation8], 16
    $region57: #{tpu_custom_call.1} parent=1 // pred_fallthru
      _
    // Predicated region
    $region58: #{tpu_custom_call.1} parent=1 // pred_check
      _
    $region59: #{tpu_custom_call.1} parent=1 // pred_check_branch
      %910 = sbr.rel (0) target = $region61
    $region60: #{tpu_custom_call.1} parent=1 // pred_region
      %912 = dma.done [#allocation10], 16
    $region61: #{tpu_custom_call.1} parent=1 // pred_fallthru
      _
    %913 = sfence
    %914 = vsyncpa [#allocation8], 1
    %915 = vsyncpa [#allocation10], 1

</llo_original>
